<compile_context>
chip_gen: v6e
topology: v6e:2x2x1
jax: 0.10.0
libtpu: 0.0.40
codegen_flags: <defaults>
</compile_context>

<pallas_src>
import functools

import numpy as np
import jax
import jax.numpy as jnp
from jax import lax
from jax.experimental import pallas as pl
from jax.experimental.pallas import tpu as pltpu


def _cost_kernel(logits_ref, bbox_ref, cls_ref, tgtbb_ref, c_ref, *,
                 num_classes, cost_bbox_w, cost_giou_w):
    # ---- segment-masked softmax over the concatenated [obj | gaze] logits ----
    lg = logits_ref[...]                                    # [TQ, K], K = nc + na
    col = lax.broadcasted_iota(jnp.int32, lg.shape, 1)
    is_obj = col < num_classes
    neg_big = jnp.float32(-1e30)

    m_obj = jnp.max(jnp.where(is_obj, lg, neg_big), axis=-1, keepdims=True)
    m_gz = jnp.max(jnp.where(is_obj, neg_big, lg), axis=-1, keepdims=True)
    e = jnp.exp(lg - jnp.where(is_obj, m_obj, m_gz))
    s_obj = jnp.sum(jnp.where(is_obj, e, 0.0), axis=-1, keepdims=True)
    s_gz = jnp.sum(jnp.where(is_obj, 0.0, e), axis=-1, keepdims=True)
    # exact reciprocal for the softmax normalizers (near-tie assignment safety)
    inv = jnp.where(is_obj,
                    pl.reciprocal(s_obj, approx=False),
                    pl.reciprocal(s_gz, approx=False))
    p = e * inv                                             # [TQ, K] per-segment softmax

    # ---- fused classification cost: one bf16 MXU pass, weights/sign folded ----
    acc = jnp.dot(p.astype(jnp.bfloat16), cls_ref[...],
                  preferred_element_type=jnp.float32)       # [TQ, TB]

    # ---- box costs (this batch's targets only) ----
    ob = bbox_ref[...]                                      # [TQ, 4] cxcywh
    tb = tgtbb_ref[...]                                     # [4, TB] cxcywh (transposed)
    cx1, cy1, w1, h1 = ob[:, 0:1], ob[:, 1:2], ob[:, 2:3], ob[:, 3:4]   # [TQ,1]
    cx2, cy2, w2, h2 = tb[0:1, :], tb[1:2, :], tb[2:3, :], tb[3:4, :]   # [1,TB]

    # L1 cdist over (cx, cy, w, h)
    cost_l1 = (jnp.abs(cx1 - cx2) + jnp.abs(cy1 - cy2)
               + jnp.abs(w1 - w2) + jnp.abs(h1 - h2))

    # generalized IoU on xyxy boxes
    x1a, y1a = cx1 - 0.5 * w1, cy1 - 0.5 * h1
    x1b, y1b = cx1 + 0.5 * w1, cy1 + 0.5 * h1
    x2a, y2a = cx2 - 0.5 * w2, cy2 - 0.5 * h2
    x2b, y2b = cx2 + 0.5 * w2, cy2 + 0.5 * h2
    area1 = w1 * h1                                         # [TQ,1]
    area2 = w2 * h2                                         # [1,TB]
    iw_raw = jnp.minimum(x1b, x2b) - jnp.maximum(x1a, x2a)  # can be negative
    ih_raw = jnp.minimum(y1b, y2b) - jnp.maximum(y1a, y2a)
    inter = jnp.maximum(iw_raw, 0.0) * jnp.maximum(ih_raw, 0.0)
    union = area1 + area2 - inter
    # enclosing extent via identity: max(hi)-min(lo) = w1 + w2 - iw_raw (> 0 for
    # boxes with positive extent, incl. the w=h=1 padding dummies) -> no clamps.
    enc = ((w1 + w2) - iw_raw) * ((h1 + h2) - ih_raw)
    eps = jnp.float32(1e-7)
    r_u = pl.reciprocal(jnp.maximum(union, eps), approx=True)   # EUP, not VALU
    r_e = pl.reciprocal(jnp.maximum(enc, eps), approx=True)
    giou = inter * r_u - 1.0 + union * r_e                  # iou - (enc-union)/enc

    c_ref[...] = acc + cost_bbox_w * cost_l1 - cost_giou_w * giou


def _pairwise_cost(logits_bqk, boxes_bq4, cls_mat, tgt_bbox_t,
                   cost_bbox, cost_giou, num_classes):
    """logits_bqk [B,Q,K] f32, boxes_bq4 [B,Q,4] f32, cls_mat [B,K,TB] bf16,
    tgt_bbox_t [B,4,TB] f32 -> C [B, Q_pad, TB] f32 (block-diagonal by batch)."""
    B, Q, K = logits_bqk.shape
    TB = cls_mat.shape[-1]

    # Adaptive row tile (single source of truth): keep ~16 live [TQ, TB] f32
    # slabs (elementwise temporaries + double-buffered output) under ~20 MiB.
    vmem_budget = 20 * 1024 * 1024
    per_row = TB * 4 * 16
    tq = min(512, max(8, vmem_budget // per_row))
    tq = min(tq, ((Q + 7) // 8) * 8)
    tq = max(8, (tq // 8) * 8)
    q_pad = ((Q + tq - 1) // tq) * tq

    if q_pad > Q:
        logits_bqk = jnp.pad(logits_bqk, ((0, 0), (0, q_pad - Q), (0, 0)))
        boxes_bq4 = jnp.pad(boxes_bq4, ((0, 0), (0, q_pad - Q), (0, 0)))

    kernel = functools.partial(_cost_kernel,
                               num_classes=int(num_classes),
                               cost_bbox_w=float(cost_bbox),
                               cost_giou_w=float(cost_giou))
    grid = (B, q_pad // tq)
    return pl.pallas_call(
        kernel,
        out_shape=jax.ShapeDtypeStruct((B, q_pad, TB), jnp.float32),
        grid=grid,
        in_specs=[
            pl.BlockSpec((None, tq, K), lambda b, q: (b, q, 0)),   # pred logits tile
            pl.BlockSpec((None, tq, 4), lambda b, q: (b, q, 0)),   # pred boxes tile
            pl.BlockSpec((None, K, TB), lambda b, q: (b, 0, 0)),   # this batch's class matrix
            pl.BlockSpec((None, 4, TB), lambda b, q: (b, 0, 0)),   # this batch's target boxes
        ],
        out_specs=pl.BlockSpec((None, tq, TB), lambda b, q: (b, q, 0)),
        compiler_params=pltpu.CompilerParams(
            dimension_semantics=("parallel", "parallel"),
            vmem_limit_bytes=48 * 1024 * 1024),
    )(logits_bqk, boxes_bq4, cls_mat, tgt_bbox_t)


def _linear_sum_assignment(cost):
    """Rectangular Hungarian (augmenting path with potentials).
    cost: np.ndarray [n_rows, n_cols]. Returns (row_ind, col_ind)."""
    cost = np.asarray(cost, dtype=np.float64)
    transposed = False
    if cost.shape[0] > cost.shape[1]:
        cost = cost.T
        transposed = True
    n, m = cost.shape  # n <= m
    INF = float("inf")
    u = [0.0] * (n + 1)
    v = [0.0] * (m + 1)
    p = [0] * (m + 1)
    way = [0] * (m + 1)
    for i in range(1, n + 1):
        p[0] = i
        j0 = 0
        minv = [INF] * (m + 1)
        used = [False] * (m + 1)
        while True:
            used[j0] = True
            i0 = p[j0]
            delta = INF
            j1 = -1
            for j in range(1, m + 1):
                if not used[j]:
                    cur = cost[i0 - 1, j - 1] - u[i0] - v[j]
                    if cur < minv[j]:
                        minv[j] = cur
                        way[j] = j0
                    if minv[j] < delta:
                        delta = minv[j]
                        j1 = j
            for j in range(m + 1):
                if used[j]:
                    u[p[j]] += delta
                    v[j] -= delta
                else:
                    minv[j] -= delta
            j0 = j1
            if p[j0] == 0:
                break
        while True:
            j1 = way[j0]
            p[j0] = p[j1]
            j0 = j1
            if j0 == 0:
                break
    rows, cols = [], []
    for j in range(1, m + 1):
        if p[j] != 0:
            rows.append(p[j] - 1)
            cols.append(j - 1)
    rows = np.array(rows, dtype=np.int64)
    cols = np.array(cols, dtype=np.int64)
    if transposed:
        rows, cols = cols, rows
    order = np.argsort(rows, kind="stable")
    return rows[order], cols[order]


def hungarian_matcher(outputs, targets, cost_class=1.0, cost_gaze=1.0,
                      cost_bbox=1.0, cost_giou=1.0):
    pred_obj = outputs["pred_object_logits"]     # [B, Q, num_classes]
    pred_gaze = outputs["pred_isgazed_logits"]   # [B, Q, num_actions]
    pred_boxes = outputs["pred_boxes"]           # [B, Q, 4]
    B, Q, num_classes = pred_obj.shape
    num_actions = pred_gaze.shape[-1]

    sizes = [int(t["boxes"].shape[0]) for t in targets]
    max_n = max(sizes) if sizes else 0
    # Block-diagonal by batch: per-batch targets padded to a common lane-dense TB.
    TB = max(128, ((max_n + 127) // 128) * 128)

    cls_rows, box_rows = [], []
    for t in targets:
        n = int(t["boxes"].shape[0])
        obj_oh = jax.nn.one_hot(t["objects"], num_classes, dtype=jnp.float32)  # [n, nc]
        gz_oh = jax.nn.one_hot(t["isgazed"], num_actions, dtype=jnp.float32)   # [n, na]
        m = jnp.concatenate([(-float(cost_class)) * obj_oh,
                             (-float(cost_gaze)) * gz_oh], axis=1).T            # [K, n]
        cls_rows.append(jnp.pad(m, ((0, 0), (0, TB - n))))                       # zero cols
        bt = t["boxes"].T.astype(jnp.float32)                                    # [4, n]
        if TB > n:
            # Non-degenerate dummies (w=h=1): finite costs, sliced off before use.
            dummy = jnp.tile(jnp.array([[0.5], [0.5], [1.0], [1.0]], jnp.float32),
                             (1, TB - n))
            bt = jnp.concatenate([bt, dummy], axis=1)
        box_rows.append(bt)
    cls_mat = jnp.stack(cls_rows).astype(jnp.bfloat16)   # [B, K, TB] pre-weighted/signed
    tgt_bbox_t = jnp.stack(box_rows)                     # [B, 4, TB]

    logits_bqk = jnp.concatenate([pred_obj, pred_gaze], axis=-1).astype(jnp.float32)
    boxes_bq4 = pred_boxes.astype(jnp.float32)

    C = _pairwise_cost(logits_bqk, boxes_bq4, cls_mat, tgt_bbox_t,
                       cost_bbox, cost_giou, num_classes)   # [B, Q_pad, TB]
    # Slice padding off ON DEVICE before the PCIe transfer.
    C = C[:, :Q, :max(max_n, 1)]
    C = np.asarray(jax.block_until_ready(C))

    # TODO(synk): linear_sum_assignment (Hungarian) is inherently sequential /
    # data-dependent; kept host-side (pure Python). A C/scipy implementation
    # would remove the end-to-end host bottleneck.
    indices = []
    for b, n in enumerate(sizes):
        sub = C[b, :, :n]
        i, j = _linear_sum_assignment(sub)
        indices.append((jnp.asarray(i, dtype=jnp.int32),
                        jnp.asarray(j, dtype=jnp.int32)))
    return indices


if __name__ == "__main__":
    key = jax.random.PRNGKey(0)
    B, Q = 2, 8
    num_classes, num_actions = 8, 2
    sizes = [3, 2]
    ks = jax.random.split(key, 8)

    outputs = {
        "pred_object_logits": jax.random.normal(ks[0], (B, Q, num_classes), jnp.float32),
        "pred_isgazed_logits": jax.random.normal(ks[1], (B, Q, num_actions), jnp.float32),
        "pred_boxes": jnp.concatenate([
            jax.random.uniform(ks[2], (B, Q, 2), minval=0.2, maxval=0.8),   # cx, cy
            jax.random.uniform(ks[3], (B, Q, 2), minval=0.1, maxval=0.4),   # w, h
        ], axis=-1).astype(jnp.float32),
    }

    targets = []
    for bi, n in enumerate(sizes):
        kk = jax.random.split(ks[4 + bi], 4)
        boxes = jnp.concatenate([
            jax.random.uniform(kk[0], (n, 2), minval=0.2, maxval=0.8),
            jax.random.uniform(kk[1], (n, 2), minval=0.1, maxval=0.4),
        ], axis=-1).astype(jnp.float32)
        targets.append({
            "boxes": boxes,
            "objects": jax.random.randint(kk[2], (n,), 0, num_classes),
            "isgazed": jax.random.randint(kk[3], (n,), 0, num_actions),
        })

    indices = hungarian_matcher(outputs, targets,
                                cost_class=1.0, cost_gaze=1.0,
                                cost_bbox=1.0, cost_giou=1.0)
    for (i, j), n in zip(indices, sizes):
        i = jax.block_until_ready(i)
        j = jax.block_until_ready(j)
        assert i.shape[0] == j.shape[0] == min(Q, n)
        assert len(set(np.asarray(i).tolist())) == int(i.shape[0])
        assert len(set(np.asarray(j).tolist())) == int(j.shape[0])
    print("KERNEL_OK")
</pallas_src>

<mosaic_0001>
module attributes {stable_mosaic.version = 11 : i64} {
  func.func @_cost_kernel(%arg0: i32, %arg1: i32, %arg2: memref<1x8x10xf32, #tpu.memory_space<vmem>>, %arg3: memref<1x8x4xf32, #tpu.memory_space<vmem>>, %arg4: memref<1x10x128xbf16, #tpu.memory_space<vmem>>, %arg5: memref<1x4x128xf32, #tpu.memory_space<vmem>>, %arg6: memref<1x8x128xf32, #tpu.memory_space<vmem>>) attributes {dimension_semantics = [#tpu.dimension_semantics<parallel>, #tpu.dimension_semantics<parallel>], iteration_bounds = array<i64: 2, 1>, scalar_prefetch = 0 : i64, scratch_operands = 0 : i64, tpu.core_type = #tpu.core_type<tc>, window_params = [{transform_indices = @transform_0, window_bounds = array<i64: 1, 8, 10>}, {transform_indices = @transform_1, window_bounds = array<i64: 1, 8, 4>}, {transform_indices = @transform_2, window_bounds = array<i64: 1, 10, 128>}, {transform_indices = @transform_3, window_bounds = array<i64: 1, 4, 128>}, {transform_indices = @transform_4, window_bounds = array<i64: 1, 8, 128>}]} {
    %c0 = arith.constant 0 : index
    %c0_0 = arith.constant 0 : index
    %c0_1 = arith.constant 0 : index
    %0 = vector.load %arg2[%c0, %c0_0, %c0_1] : memref<1x8x10xf32, #tpu.memory_space<vmem>>, vector<1x8x10xf32>
    %1 = vector.shape_cast %0 : vector<1x8x10xf32> to vector<8x10xf32>
    %2 = tpu.iota {dimensions = array<i32: 1>} : vector<8x10xi32>
    %c8_i32 = arith.constant 8 : i32
    %3 = vector.broadcast %c8_i32 : i32 to vector<8x10xi32>
    %4 = arith.cmpi slt, %2, %3 : vector<8x10xi32>
    %cst = arith.constant -1.000000e+30 : f32
    %5 = vector.broadcast %cst : f32 to vector<8x10xf32>
    %6 = arith.select %4, %1, %5 : vector<8x10xi1>, vector<8x10xf32>
    %cst_2 = arith.constant dense<0xFF800000> : vector<8xf32>
    %7 = vector.multi_reduction <maximumf>, %6, %cst_2 [1] : vector<8x10xf32> to vector<8xf32>
    %8 = vector.shape_cast %7 : vector<8xf32> to vector<8x1xf32>
    %cst_3 = arith.constant -1.000000e+30 : f32
    %9 = vector.broadcast %cst_3 : f32 to vector<8x10xf32>
    %10 = arith.select %4, %9, %1 : vector<8x10xi1>, vector<8x10xf32>
    %cst_4 = arith.constant dense<0xFF800000> : vector<8xf32>
    %11 = vector.multi_reduction <maximumf>, %10, %cst_4 [1] : vector<8x10xf32> to vector<8xf32>
    %12 = vector.shape_cast %11 : vector<8xf32> to vector<8x1xf32>
    %13 = vector.shape_cast %8 : vector<8x1xf32> to vector<8x1xf32>
    %14 = vector.broadcast %13 : vector<8x1xf32> to vector<8x10xf32>
    %15 = vector.shape_cast %12 : vector<8x1xf32> to vector<8x1xf32>
    %16 = vector.broadcast %15 : vector<8x1xf32> to vector<8x10xf32>
    %17 = arith.select %4, %14, %16 : vector<8x10xi1>, vector<8x10xf32>
    %18 = arith.subf %1, %17 : vector<8x10xf32>
    %19 = math.exp %18 : vector<8x10xf32>
    %cst_5 = arith.constant 0.000000e+00 : f32
    %20 = vector.broadcast %cst_5 : f32 to vector<8x10xf32>
    %21 = arith.select %4, %19, %20 : vector<8x10xi1>, vector<8x10xf32>
    %cst_6 = arith.constant dense<0.000000e+00> : vector<8xf32>
    %22 = vector.multi_reduction <add>, %21, %cst_6 [1] : vector<8x10xf32> to vector<8xf32>
    %23 = vector.shape_cast %22 : vector<8xf32> to vector<8x1xf32>
    %cst_7 = arith.constant 0.000000e+00 : f32
    %24 = vector.broadcast %cst_7 : f32 to vector<8x10xf32>
    %25 = arith.select %4, %24, %19 : vector<8x10xi1>, vector<8x10xf32>
    %cst_8 = arith.constant dense<0.000000e+00> : vector<8xf32>
    %26 = vector.multi_reduction <add>, %25, %cst_8 [1] : vector<8x10xf32> to vector<8xf32>
    %27 = vector.shape_cast %26 : vector<8xf32> to vector<8x1xf32>
    %28 = tpu.reciprocal %23 : vector<8x1xf32> -> vector<8x1xf32>
    %29 = tpu.reciprocal %27 : vector<8x1xf32> -> vector<8x1xf32>
    %30 = vector.shape_cast %28 : vector<8x1xf32> to vector<8x1xf32>
    %31 = vector.broadcast %30 : vector<8x1xf32> to vector<8x10xf32>
    %32 = vector.shape_cast %29 : vector<8x1xf32> to vector<8x1xf32>
    %33 = vector.broadcast %32 : vector<8x1xf32> to vector<8x10xf32>
    %34 = arith.select %4, %31, %33 : vector<8x10xi1>, vector<8x10xf32>
    %35 = arith.mulf %19, %34 : vector<8x10xf32>
    %36 = arith.truncf %35 : vector<8x10xf32> to vector<8x10xbf16>
    %c0_9 = arith.constant 0 : index
    %c0_10 = arith.constant 0 : index
    %c0_11 = arith.constant 0 : index
    %37 = vector.load %arg4[%c0_9, %c0_10, %c0_11] : memref<1x10x128xbf16, #tpu.memory_space<vmem>>, vector<1x10x128xbf16>
    %38 = vector.shape_cast %37 : vector<1x10x128xbf16> to vector<10x128xbf16>
    %cst_12 = arith.constant dense<0.000000e+00> : vector<8x128xf32>
    %39 = tpu.matmul %36, %38, %cst_12 {dimension_numbers = #tpu.dot_dimension_numbers<[1], [0], [0], [1], [0, 0, 1, 1], [], []>} : vector<8x10xbf16>, vector<10x128xbf16>, vector<8x128xf32> -> vector<8x128xf32>
    %c0_13 = arith.constant 0 : index
    %c0_14 = arith.constant 0 : index
    %c0_15 = arith.constant 0 : index
    %40 = vector.load %arg3[%c0_13, %c0_14, %c0_15] : memref<1x8x4xf32, #tpu.memory_space<vmem>>, vector<1x8x4xf32>
    %41 = vector.shape_cast %40 : vector<1x8x4xf32> to vector<8x4xf32>
    %c0_16 = arith.constant 0 : index
    %c0_17 = arith.constant 0 : index
    %c0_18 = arith.constant 0 : index
    %42 = vector.load %arg5[%c0_16, %c0_17, %c0_18] : memref<1x4x128xf32, #tpu.memory_space<vmem>>, vector<1x4x128xf32>
    %43 = vector.shape_cast %42 : vector<1x4x128xf32> to vector<4x128xf32>
    %44 = vector.extract_strided_slice %41 {offsets = [0, 0], sizes = [8, 1], strides = [1, 1]} : vector<8x4xf32> to vector<8x1xf32>
    %45 = vector.extract_strided_slice %41 {offsets = [0, 1], sizes = [8, 1], strides = [1, 1]} : vector<8x4xf32> to vector<8x1xf32>
    %46 = vector.extract_strided_slice %41 {offsets = [0, 2], sizes = [8, 1], strides = [1, 1]} : vector<8x4xf32> to vector<8x1xf32>
    %47 = vector.extract_strided_slice %41 {offsets = [0, 3], sizes = [8, 1], strides = [1, 1]} : vector<8x4xf32> to vector<8x1xf32>
    %48 = vector.extract_strided_slice %43 {offsets = [0, 0], sizes = [1, 128], strides = [1, 1]} : vector<4x128xf32> to vector<1x128xf32>
    %49 = vector.extract_strided_slice %43 {offsets = [1, 0], sizes = [1, 128], strides = [1, 1]} : vector<4x128xf32> to vector<1x128xf32>
    %50 = vector.extract_strided_slice %43 {offsets = [2, 0], sizes = [1, 128], strides = [1, 1]} : vector<4x128xf32> to vector<1x128xf32>
    %51 = vector.extract_strided_slice %43 {offsets = [3, 0], sizes = [1, 128], strides = [1, 1]} : vector<4x128xf32> to vector<1x128xf32>
    %52 = vector.broadcast %44 : vector<8x1xf32> to vector<8x128xf32>
    %53 = vector.broadcast %48 : vector<1x128xf32> to vector<8x128xf32>
    %54 = arith.subf %52, %53 : vector<8x128xf32>
    %55 = math.absf %54 : vector<8x128xf32>
    %56 = vector.broadcast %45 : vector<8x1xf32> to vector<8x128xf32>
    %57 = vector.broadcast %49 : vector<1x128xf32> to vector<8x128xf32>
    %58 = arith.subf %56, %57 : vector<8x128xf32>
    %59 = math.absf %58 : vector<8x128xf32>
    %60 = arith.addf %55, %59 : vector<8x128xf32>
    %61 = vector.broadcast %46 : vector<8x1xf32> to vector<8x128xf32>
    %62 = vector.broadcast %50 : vector<1x128xf32> to vector<8x128xf32>
    %63 = arith.subf %61, %62 : vector<8x128xf32>
    %64 = math.absf %63 : vector<8x128xf32>
    %65 = arith.addf %60, %64 : vector<8x128xf32>
    %66 = vector.broadcast %47 : vector<8x1xf32> to vector<8x128xf32>
    %67 = vector.broadcast %51 : vector<1x128xf32> to vector<8x128xf32>
    %68 = arith.subf %66, %67 : vector<8x128xf32>
    %69 = math.absf %68 : vector<8x128xf32>
    %70 = arith.addf %65, %69 : vector<8x128xf32>
    %cst_19 = arith.constant 5.000000e-01 : f32
    %71 = vector.broadcast %cst_19 : f32 to vector<8x1xf32>
    %72 = arith.mulf %71, %46 : vector<8x1xf32>
    %73 = arith.subf %44, %72 : vector<8x1xf32>
    %cst_20 = arith.constant 5.000000e-01 : f32
    %74 = vector.broadcast %cst_20 : f32 to vector<8x1xf32>
    %75 = arith.mulf %74, %47 : vector<8x1xf32>
    %76 = arith.subf %45, %75 : vector<8x1xf32>
    %cst_21 = arith.constant 5.000000e-01 : f32
    %77 = vector.broadcast %cst_21 : f32 to vector<8x1xf32>
    %78 = arith.mulf %77, %46 : vector<8x1xf32>
    %79 = arith.addf %44, %78 : vector<8x1xf32>
    %cst_22 = arith.constant 5.000000e-01 : f32
    %80 = vector.broadcast %cst_22 : f32 to vector<8x1xf32>
    %81 = arith.mulf %80, %47 : vector<8x1xf32>
    %82 = arith.addf %45, %81 : vector<8x1xf32>
    %cst_23 = arith.constant 5.000000e-01 : f32
    %83 = vector.broadcast %cst_23 : f32 to vector<1x128xf32>
    %84 = arith.mulf %83, %50 : vector<1x128xf32>
    %85 = arith.subf %48, %84 : vector<1x128xf32>
    %cst_24 = arith.constant 5.000000e-01 : f32
    %86 = vector.broadcast %cst_24 : f32 to vector<1x128xf32>
    %87 = arith.mulf %86, %51 : vector<1x128xf32>
    %88 = arith.subf %49, %87 : vector<1x128xf32>
    %cst_25 = arith.constant 5.000000e-01 : f32
    %89 = vector.broadcast %cst_25 : f32 to vector<1x128xf32>
    %90 = arith.mulf %89, %50 : vector<1x128xf32>
    %91 = arith.addf %48, %90 : vector<1x128xf32>
    %cst_26 = arith.constant 5.000000e-01 : f32
    %92 = vector.broadcast %cst_26 : f32 to vector<1x128xf32>
    %93 = arith.mulf %92, %51 : vector<1x128xf32>
    %94 = arith.addf %49, %93 : vector<1x128xf32>
    %95 = arith.mulf %46, %47 : vector<8x1xf32>
    %96 = arith.mulf %50, %51 : vector<1x128xf32>
    %97 = vector.broadcast %79 : vector<8x1xf32> to vector<8x128xf32>
    %98 = vector.broadcast %91 : vector<1x128xf32> to vector<8x128xf32>
    %99 = arith.minimumf %97, %98 : vector<8x128xf32>
    %100 = vector.broadcast %73 : vector<8x1xf32> to vector<8x128xf32>
    %101 = vector.broadcast %85 : vector<1x128xf32> to vector<8x128xf32>
    %102 = arith.maximumf %100, %101 : vector<8x128xf32>
    %103 = arith.subf %99, %102 : vector<8x128xf32>
    %104 = vector.broadcast %82 : vector<8x1xf32> to vector<8x128xf32>
    %105 = vector.broadcast %94 : vector<1x128xf32> to vector<8x128xf32>
    %106 = arith.minimumf %104, %105 : vector<8x128xf32>
    %107 = vector.broadcast %76 : vector<8x1xf32> to vector<8x128xf32>
    %108 = vector.broadcast %88 : vector<1x128xf32> to vector<8x128xf32>
    %109 = arith.maximumf %107, %108 : vector<8x128xf32>
    %110 = arith.subf %106, %109 : vector<8x128xf32>
    %cst_27 = arith.constant 0.000000e+00 : f32
    %111 = vector.broadcast %cst_27 : f32 to vector<8x128xf32>
    %112 = arith.maximumf %103, %111 : vector<8x128xf32>
    %cst_28 = arith.constant 0.000000e+00 : f32
    %113 = vector.broadcast %cst_28 : f32 to vector<8x128xf32>
    %114 = arith.maximumf %110, %113 : vector<8x128xf32>
    %115 = arith.mulf %112, %114 : vector<8x128xf32>
    %116 = vector.broadcast %95 : vector<8x1xf32> to vector<8x128xf32>
    %117 = vector.broadcast %96 : vector<1x128xf32> to vector<8x128xf32>
    %118 = arith.addf %116, %117 : vector<8x128xf32>
    %119 = arith.subf %118, %115 : vector<8x128xf32>
    %120 = vector.broadcast %46 : vector<8x1xf32> to vector<8x128xf32>
    %121 = vector.broadcast %50 : vector<1x128xf32> to vector<8x128xf32>
    %122 = arith.addf %120, %121 : vector<8x128xf32>
    %123 = arith.subf %122, %103 : vector<8x128xf32>
    %124 = vector.broadcast %47 : vector<8x1xf32> to vector<8x128xf32>
    %125 = vector.broadcast %51 : vector<1x128xf32> to vector<8x128xf32>
    %126 = arith.addf %124, %125 : vector<8x128xf32>
    %127 = arith.subf %126, %110 : vector<8x128xf32>
    %128 = arith.mulf %123, %127 : vector<8x128xf32>
    %cst_29 = arith.constant 1.000000e-07 : f32
    %129 = vector.broadcast %cst_29 : f32 to vector<8x128xf32>
    %130 = arith.maximumf %119, %129 : vector<8x128xf32>
    %131 = tpu.reciprocal %130 {approx = true} : vector<8x128xf32> -> vector<8x128xf32>
    %cst_30 = arith.constant 1.000000e-07 : f32
    %132 = vector.broadcast %cst_30 : f32 to vector<8x128xf32>
    %133 = arith.maximumf %128, %132 : vector<8x128xf32>
    %134 = tpu.reciprocal %133 {approx = true} : vector<8x128xf32> -> vector<8x128xf32>
    %135 = arith.mulf %115, %131 : vector<8x128xf32>
    %cst_31 = arith.constant 1.000000e+00 : f32
    %136 = vector.broadcast %cst_31 : f32 to vector<8x128xf32>
    %137 = arith.subf %135, %136 : vector<8x128xf32>
    %138 = arith.mulf %119, %134 : vector<8x128xf32>
    %139 = arith.addf %137, %138 : vector<8x128xf32>
    %cst_32 = arith.constant 1.000000e+00 : f32
    %140 = vector.broadcast %cst_32 : f32 to vector<8x128xf32>
    %141 = arith.mulf %140, %70 : vector<8x128xf32>
    %142 = arith.addf %39, %141 : vector<8x128xf32>
    %cst_33 = arith.constant 1.000000e+00 : f32
    %143 = vector.broadcast %cst_33 : f32 to vector<8x128xf32>
    %144 = arith.mulf %143, %139 : vector<8x128xf32>
    %145 = arith.subf %142, %144 : vector<8x128xf32>
    %c0_34 = arith.constant 0 : index
    %c0_35 = arith.constant 0 : index
    %c0_36 = arith.constant 0 : index
    %146 = vector.load %arg6[%c0_34, %c0_35, %c0_36] : memref<1x8x128xf32, #tpu.memory_space<vmem>>, vector<1x8x128xf32>
    %147 = vector.shape_cast %146 : vector<1x8x128xf32> to vector<8x128xf32>
    %148 = vector.shape_cast %145 : vector<8x128xf32> to vector<1x8x128xf32>
    tpu.vector_store %arg6[%c0_34, %c0_35, %c0_36], %148 {strides = array<i32>} : memref<1x8x128xf32, #tpu.memory_space<vmem>>, vector<1x8x128xf32>,
    return
  }
  func.func @transform_0(%arg0: i32, %arg1: i32) -> (i32, i32, i32) {
    %c0_i32 = arith.constant 0 : i32
    %c0_i32_0 = arith.constant 0 : i32
    return %arg0, %arg1, %c0_i32 : i32, i32, i32
  }
  func.func @transform_1(%arg0: i32, %arg1: i32) -> (i32, i32, i32) {
    %c0_i32 = arith.constant 0 : i32
    %c0_i32_0 = arith.constant 0 : i32
    return %arg0, %arg1, %c0_i32 : i32, i32, i32
  }
  func.func @transform_2(%arg0: i32, %arg1: i32) -> (i32, i32, i32) {
    %c0_i32 = arith.constant 0 : i32
    %c0_i32_0 = arith.constant 0 : i32
    %c0_i32_1 = arith.constant 0 : i32
    return %arg0, %c0_i32, %c0_i32_0 : i32, i32, i32
  }
  func.func @transform_3(%arg0: i32, %arg1: i32) -> (i32, i32, i32) {
    %c0_i32 = arith.constant 0 : i32
    %c0_i32_0 = arith.constant 0 : i32
    %c0_i32_1 = arith.constant 0 : i32
    return %arg0, %c0_i32, %c0_i32_0 : i32, i32, i32
  }
  func.func @transform_4(%arg0: i32, %arg1: i32) -> (i32, i32, i32) {
    %c0_i32 = arith.constant 0 : i32
    %c0_i32_0 = arith.constant 0 : i32
    return %arg0, %arg1, %c0_i32 : i32, i32, i32
  }
}

</mosaic_0001>

<llo_original>
// kernel: tpu_custom_call.1
$region0: #{tpu_custom_call.1}
  #allocation0 [shape = 'u32[]', space=smem, size = 0x4, offset = 0x4, fixed_abs, tag = 'smem constant byte address 0x4 - core index']
  #allocation1 [shape = 'u32[144,128]{1,0:T(1,128)}', space=vmem, size = 0x12000, scoped, tag = 'internal scratch']
  %s0 = inlined_call_operand.vmem [shape: f32[2,8,10], index: 0, kind: input, shape index: {}]
  %s1 = inlined_call_operand.vmem [shape: f32[2,8,4], index: 1, kind: input, shape index: {}]
  %s2 = inlined_call_operand.vmem [shape: bf16[2,10,128], index: 2, kind: input, shape index: {}]
  %s3 = inlined_call_operand.vmem [shape: f32[2,4,128], index: 3, kind: input, shape index: {}]
  %s4 = inlined_call_operand.hbm [shape: f32[2,8,128], index: 4, kind: output, shape index: {}]
  %s5 = sld [smem:[#allocation0]]
  $region49: #{tpu_custom_call.1} parent=0
    _
  %s7 = ssub.s32 1, %s5
  %s8 = scalar_select 0, %s7, %s5
  $region1: #{tpu_custom_call.1} parent=0
    #allocation2 [shape = 'u8[8192]{0}', space=vmem, size = 0x2000, scoped, tag = 'output window, operand 0']
    #allocation3 [shape = 's32[2]{0}', space=sflag, size = 0x8, scoped, tag = 'scoped memory for tpu_custom_call.1']
    %9 = vsyncpa [#allocation3], 0
    %s10 = scalar_lea.sflag [#allocation3], 1
    %11 = vsyncpa %s10, 0
    loop: start=0, step=1, limit=4
    $region2: #{tpu_custom_call.1} parent=1 // loop_pre_header
      _
    $region3: #{tpu_custom_call.1} parent=1 // loop_header
      %s13 = sphi 0, %s17
      %p14 = scmp.ge.s32.totalorder %s13, 4
      %s20 = sphi 0, %s32
      %s21 = sphi 0, %s28
      %s22 = sphi 0, %s20
      %s23 = sphi 0, %s21
      %s24 = sphi 0, %s22
      %s25 = sphi 0, %s23
      %s37 = sphi 0, %s39
      %s40 = sphi 0, %s37
      %s41 = sphi 0, %s40
      %s57 = sphi 0, %s41
      %s65 = sphi 0, %s67
      %s68 = sphi 0, %s65
      %s69 = sphi 0, %s68
      %s85 = sphi 0, %s69
      %s91 = sphi 0, %s93
      %s94 = sphi 0, %s91
      %s95 = sphi 0, %s94
      %s111 = sphi 0, %s95
      %s117 = sphi 0, %s119
      %s120 = sphi 0, %s117
      %s121 = sphi 0, %s120
      %s137 = sphi 0, %s121
      %s145 = sphi 0, %s147
      %s148 = sphi 0, %s145
      %s149 = sphi 0, %s148
      %s165 = sphi 0, %s149
    $region4: #{tpu_custom_call.1} parent=1 // loop_header_branch
      %16 = sbr.rel (%p14) target = $region8
    $region5: #{tpu_custom_call.1} parent=1 // loop_body
      %s18 = ssub.s32 %s13, 1
      %s19 = ssub.s32 %s13, 2
      %s26 = sadd.s32 1, %s21
      %p27 = scmp.ge.s32.totalorder %s26, 1
      %s28 = scalar_select %p27, 0, %s26
      %s29 = sadd.s32 1, %s20
      %s30 = scalar_select %p27, %s29, %s20
      %p31 = scmp.ge.s32.totalorder %s30, 2
      %s32 = scalar_select %p31, 0, %s30
      %s33 = ssub.s32 %s20, %s32
      %s34 = ssub.s32 %s21, %s28
      %s35 = sor.u32 %s33, %s34
      %p36 = scmp.eq.s32.totalorder %s35, 0
      %s38 = sadd.s32 %s37, 1
      %s39 = scalar_select %p36, %s37, %s38
      %p42 = pneg %p36
      %p43 = scmp.eq.s32.totalorder %s13, 1
      %p44 = por %p42, %p43
      %p45 = scmp.ne.s32.totalorder %s37, %s40
      %p46 = scmp.eq.s32.totalorder %s13, 0
      %p47 = por %p45, %p46
      %p48 = scmp.ne.s32.totalorder %s37, %s40
      %p49 = scmp.eq.s32.totalorder %s18, 1
      %p50 = por %p48, %p49
      %p51 = scmp.ne.s32.totalorder %s40, %s41
      %p52 = scmp.eq.s32.totalorder %s18, 0
      %p53 = por %p51, %p52
      %p54 = scmp.ne.s32.totalorder %s40, %s41
      %p55 = scmp.eq.s32.totalorder %s19, 1
      %p56 = por %p54, %p55
      %p58 = scmp.ne.s32.totalorder %s41, %s57
      %p59 = scmp.eq.s32.totalorder %s19, 0
      %p60 = por %p58, %p59
      %s61 = ssub.s32 %s20, %s32
      %s62 = ssub.s32 %s21, %s28
      %s63 = sor.u32 %s61, %s62
      %p64 = scmp.eq.s32.totalorder %s63, 0
      %s66 = sadd.s32 %s65, 1
      %s67 = scalar_select %p64, %s65, %s66
      %p70 = pneg %p64
      %p71 = scmp.eq.s32.totalorder %s13, 1
      %p72 = por %p70, %p71
      %p73 = scmp.ne.s32.totalorder %s65, %s68
      %p74 = scmp.eq.s32.totalorder %s13, 0
      %p75 = por %p73, %p74
      %p76 = scmp.ne.s32.totalorder %s65, %s68
      %p77 = scmp.eq.s32.totalorder %s18, 1
      %p78 = por %p76, %p77
      %p79 = scmp.ne.s32.totalorder %s68, %s69
      %p80 = scmp.eq.s32.totalorder %s18, 0
      %p81 = por %p79, %p80
      %p82 = scmp.ne.s32.totalorder %s68, %s69
      %p83 = scmp.eq.s32.totalorder %s19, 1
      %p84 = por %p82, %p83
      %p86 = scmp.ne.s32.totalorder %s69, %s85
      %p87 = scmp.eq.s32.totalorder %s19, 0
      %p88 = por %p86, %p87
      %s89 = ssub.s32 %s20, %s32
      %p90 = scmp.eq.s32.totalorder %s89, 0
      %s92 = sadd.s32 %s91, 1
      %s93 = scalar_select %p90, %s91, %s92
      %p96 = pneg %p90
      %p97 = scmp.eq.s32.totalorder %s13, 1
      %p98 = por %p96, %p97
      %p99 = scmp.ne.s32.totalorder %s91, %s94
      %p100 = scmp.eq.s32.totalorder %s13, 0
      %p101 = por %p99, %p100
      %p102 = scmp.ne.s32.totalorder %s91, %s94
      %p103 = scmp.eq.s32.totalorder %s18, 1
      %p104 = por %p102, %p103
      %p105 = scmp.ne.s32.totalorder %s94, %s95
      %p106 = scmp.eq.s32.totalorder %s18, 0
      %p107 = por %p105, %p106
      %p108 = scmp.ne.s32.totalorder %s94, %s95
      %p109 = scmp.eq.s32.totalorder %s19, 1
      %p110 = por %p108, %p109
      %p112 = scmp.ne.s32.totalorder %s95, %s111
      %p113 = scmp.eq.s32.totalorder %s19, 0
      %p114 = por %p112, %p113
      %s115 = ssub.s32 %s20, %s32
      %p116 = scmp.eq.s32.totalorder %s115, 0
      %s118 = sadd.s32 %s117, 1
      %s119 = scalar_select %p116, %s117, %s118
      %p122 = pneg %p116
      %p123 = scmp.eq.s32.totalorder %s13, 1
      %p124 = por %p122, %p123
      %p125 = scmp.ne.s32.totalorder %s117, %s120
      %p126 = scmp.eq.s32.totalorder %s13, 0
      %p127 = por %p125, %p126
      %p128 = scmp.ne.s32.totalorder %s117, %s120
      %p129 = scmp.eq.s32.totalorder %s18, 1
      %p130 = por %p128, %p129
      %p131 = scmp.ne.s32.totalorder %s120, %s121
      %p132 = scmp.eq.s32.totalorder %s18, 0
      %p133 = por %p131, %p132
      %p134 = scmp.ne.s32.totalorder %s120, %s121
      %p135 = scmp.eq.s32.totalorder %s19, 1
      %p136 = por %p134, %p135
      %p138 = scmp.ne.s32.totalorder %s121, %s137
      %p139 = scmp.eq.s32.totalorder %s19, 0
      %p140 = por %p138, %p139
      %s141 = ssub.s32 %s20, %s32
      %s142 = ssub.s32 %s21, %s28
      %s143 = sor.u32 %s141, %s142
      %p144 = scmp.eq.s32.totalorder %s143, 0
      %s146 = sadd.s32 %s145, 1
      %s147 = scalar_select %p144, %s145, %s146
      %p150 = pneg %p144
      %p151 = scmp.eq.s32.totalorder %s13, 1
      %p152 = por %p150, %p151
      %p153 = scmp.ne.s32.totalorder %s145, %s148
      %p154 = scmp.eq.s32.totalorder %s13, 0
      %p155 = por %p153, %p154
      %p156 = scmp.ne.s32.totalorder %s145, %s148
      %p157 = scmp.eq.s32.totalorder %s18, 1
      %p158 = por %p156, %p157
      %p159 = scmp.ne.s32.totalorder %s148, %s149
      %p160 = scmp.eq.s32.totalorder %s18, 0
      %p161 = por %p159, %p160
      %p162 = scmp.ne.s32.totalorder %s148, %s149
      %p163 = scmp.eq.s32.totalorder %s19, 1
      %p164 = por %p162, %p163
      %p166 = scmp.ne.s32.totalorder %s149, %s165
      %p167 = scmp.eq.s32.totalorder %s19, 0
      %p168 = por %p166, %p167
      %p169 = scmp.le.s32.totalorder 1, %s13
      %p170 = scmp.lt.s32.totalorder %s13, 3
      %p171 = pnand %p169, %p170
      %p172 = pneg %p171
      // Predicated region
      $region9: #{tpu_custom_call.1} parent=5 // pred_check
        _
      $region10: #{tpu_custom_call.1} parent=5 // pred_check_branch
        %174 = sbr.rel (%p171) target = $region12
      $region11: #{tpu_custom_call.1} parent=5 // pred_region
        %s175 = ssub.s32 %s13, 1
      $region12: #{tpu_custom_call.1} parent=5 // pred_fallthru
        _
      %p176 = scmp.lt.s32.totalorder %s13, 2
      // Predicated region
      $region13: #{tpu_custom_call.1} parent=5 // pred_check
        %p177 = pneg %p176
      $region14: #{tpu_custom_call.1} parent=5 // pred_check_branch
        %179 = sbr.rel (%p177) target = $region16
      $region15: #{tpu_custom_call.1} parent=5 // pred_region
        // Predicated region
        $region17: #{tpu_custom_call.1} parent=15 // pred_check
          %p180 = pneg %p47
        $region18: #{tpu_custom_call.1} parent=15 // pred_check_branch
          %182 = sbr.rel (%p180) target = $region20
        $region19: #{tpu_custom_call.1} parent=15 // pred_region
          %p183 = scmp.lt.s32.totalorder %s20, 1
          %s184 = scalar_select %p183, %s20, 1
          %p185 = scmp.lt.s32.totalorder %s21, 0
          %s186 = scalar_select %p185, %s21, 0
          %s187 = sadd.s32 %s186, %s184
          %s188 = smul.addr %s187, 8
          %s189 = scalar_lea.vmem %s0, %s188
        $region20: #{tpu_custom_call.1} parent=15 // pred_fallthru
          _
        // Predicated region
        $region21: #{tpu_custom_call.1} parent=15 // pred_check
          %p190 = pneg %p75
        $region22: #{tpu_custom_call.1} parent=15 // pred_check_branch
          %192 = sbr.rel (%p190) target = $region24
        $region23: #{tpu_custom_call.1} parent=15 // pred_region
          %p193 = scmp.lt.s32.totalorder %s20, 1
          %s194 = scalar_select %p193, %s20, 1
          %p195 = scmp.lt.s32.totalorder %s21, 0
          %s196 = scalar_select %p195, %s21, 0
          %s197 = sadd.s32 %s196, %s194
          %s198 = smul.addr %s197, 8
          %s199 = scalar_lea.vmem %s1, %s198
        $region24: #{tpu_custom_call.1} parent=15 // pred_fallthru
          _
        // Predicated region
        $region25: #{tpu_custom_call.1} parent=15 // pred_check
          %p200 = pneg %p101
        $region26: #{tpu_custom_call.1} parent=15 // pred_check_branch
          %202 = sbr.rel (%p200) target = $region28
        $region27: #{tpu_custom_call.1} parent=15 // pred_region
          %p203 = scmp.lt.s32.totalorder %s20, 1
          %s204 = scalar_select %p203, %s20, 1
          %s205 = smul.addr %s204, 2
          %s206 = smul.addr %s205, 4
          %s207 = scalar_lea.vmem %s2, %s206
        $region28: #{tpu_custom_call.1} parent=15 // pred_fallthru
          _
        // Predicated region
        $region29: #{tpu_custom_call.1} parent=15 // pred_check
          %p208 = pneg %p127
        $region30: #{tpu_custom_call.1} parent=15 // pred_check_branch
          %210 = sbr.rel (%p208) target = $region32
        $region31: #{tpu_custom_call.1} parent=15 // pred_region
          %p211 = scmp.lt.s32.totalorder %s20, 1
          %s212 = scalar_select %p211, %s20, 1
          %s213 = smul.addr %s212, 4
          %s214 = scalar_lea.vmem %s3, %s213
        $region32: #{tpu_custom_call.1} parent=15 // pred_fallthru
          _
      $region16: #{tpu_custom_call.1} parent=5 // pred_fallthru
        _
      %p215 = scmp.le.s32.totalorder 1, %s13
      %p216 = scmp.lt.s32.totalorder %s13, 3
      %p217 = pnand %p215, %p216
      %p218 = pneg %p217
      // Predicated region
      $region33: #{tpu_custom_call.1} parent=5 // pred_check
        _
      $region34: #{tpu_custom_call.1} parent=5 // pred_check_branch
        %220 = sbr.rel (%p217) target = $region36
      $region35: #{tpu_custom_call.1} parent=5 // pred_region
        %s221 = ssub.s32 %s13, 1
        %p222 = scmp.lt.s32.totalorder %s22, 1
        %s223 = scalar_select %p222, %s22, 1
        %p224 = scmp.lt.s32.totalorder %s23, 0
        %s225 = scalar_select %p224, %s23, 0
        %s226 = sadd.s32 %s225, %s223
        %s227 = smul.addr %s226, 8
        %s228 = scalar_lea.vmem %s0, %s227
        %p229 = pneg %p53
        %p230 = pneg %p50
        %p231 = scmp.lt.s32.totalorder %s22, 1
        %s232 = scalar_select %p231, %s22, 1
        %p233 = scmp.lt.s32.totalorder %s23, 0
        %s234 = scalar_select %p233, %s23, 0
        %s235 = sadd.s32 %s234, %s232
        %s236 = smul.addr %s235, 8
        %s237 = scalar_lea.vmem %s1, %s236
        %p238 = pneg %p81
        %p239 = pneg %p78
        %p240 = scmp.lt.s32.totalorder %s22, 1
        %s241 = scalar_select %p240, %s22, 1
        %s242 = smul.addr %s241, 2
        %s243 = smul.addr %s242, 4
        %s244 = scalar_lea.vmem %s2, %s243
        %p245 = pneg %p107
        %p246 = pneg %p104
        %p247 = scmp.lt.s32.totalorder %s22, 1
        %s248 = scalar_select %p247, %s22, 1
        %s249 = smul.addr %s248, 4
        %s250 = scalar_lea.vmem %s3, %s249
        %p251 = pneg %p133
        %p252 = pneg %p130
        %p253 = pneg %p161
        %p254 = pneg %p158
        %s255 = sand.u32 %s148, 1
        %s256 = scalar_lea.sflag [#allocation3], %s255
        %s257 = sand.u32 %s148, 1
        %s258 = smul.addr %s257, 8
        %s259 = scalar_lea.vmem [#allocation2], %s258
        %p260 = scmp.lt.s32.totalorder %s22, 1
        %s261 = scalar_select %p260, %s22, 1
        %p262 = scmp.lt.s32.totalorder %s23, 0
        %s263 = scalar_select %p262, %s23, 0
        %s264 = sadd.s32 %s263, %s261
        %s265 = smul.addr %s264, 8
        %s266 = scalar_lea.vmem %s0, %s265
        %p267 = scmp.lt.s32.totalorder %s22, 1
        %s268 = scalar_select %p267, %s22, 1
        %p269 = scmp.lt.s32.totalorder %s23, 0
        %s270 = scalar_select %p269, %s23, 0
        %s271 = sadd.s32 %s270, %s268
        %s272 = smul.addr %s271, 8
        %s273 = scalar_lea.vmem %s1, %s272
        %p274 = scmp.lt.s32.totalorder %s22, 1
        %s275 = scalar_select %p274, %s22, 1
        %s276 = smul.addr %s275, 2
        %s277 = smul.addr %s276, 4
        %s278 = scalar_lea.vmem %s2, %s277
        %p279 = scmp.lt.s32.totalorder %s22, 1
        %s280 = scalar_select %p279, %s22, 1
        %s281 = smul.addr %s280, 4
        %s282 = scalar_lea.vmem %s3, %s281
        %v284 = vld [vmem:[%s266] sm:$0xff]
        %v285 = vlaneseq
        %v286 = vand.u32 %v285, 127
        %vm287 = vcmp.lt.s32.totalorder %v286, 8
        %v288 = vsel %vm287, %v284, -1e+30
        %vm289 = vcmask 80896
        %v290 = vsel %vm289, %v288, -inf
        %291 = vmax.xlane.f32.xlu0 %v290
        %v292 = vpop.xlane.xlu0 %291
        %v293 = vsel %vm287, -1e+30, %v284
        %v294 = vsel %vm289, %v293, -inf
        %295 = vmax.xlane.f32.xlu0 %v294
        %v296 = vpop.xlane.xlu0 %295
        %v297 = vsel %vm287, %v292, %v296
        %v298 = vsub.f32 %v284, %v297
        %v299 = vmul.f32 %v298, 1.442695
        %v300 = vpow.pop %v299
        %v301 = vsel %vm287, %v300, 0.0
        %v302 = vsel %vm289, %v301, 0.0
        %303 = vadd.xlane.f32.xlu0 %v302
        %v304 = vpop.xlane.xlu0 %303
        %v305 = vsel %vm287, 0.0, %v300
        %v306 = vsel %vm289, %v305, 0.0
        %307 = vadd.xlane.f32.xlu0 %v306
        %v308 = vpop.xlane.xlu0 %307
        %v309 = vrcp.pop %v304
        %v310 = vrcp.pop %v308
        %v311 = vsel %vm287, %v309, %v310
        %v312 = vmul.f32 %v300, %v311
        %v313 = vpack.c.bf16 %v312, %v312
        %v314 = vld [vmem:[%s278] sm:$0xf]
        %v315 = vld [vmem:[%s278 + $0x4] sm:$0x1]
        %v316 = vld [vmem:[%s273] sm:$0xff]
        %v317 = vld [vmem:[%s282] sm:$0xf]
        %319 = vset.pattern.permute.xlu0 0
        %320 = vperm.xlu0 %319, %v316
        %v321 = vpop.permute.xlu0 %320
        %v323 = vlaneseq
        %v324 = vshrl.u32 %v323, 7
        %v325 = vsub.s32 0, %v324
        %v326 = vrot.slane %v317, %v325
        %v327 = vsub.f32 %v321, %v326
        %v328 = vand.u32 2147483647, %v327
        %329 = vset.pattern.permute.xlu0 1
        %330 = vperm.xlu0 %329, %v316
        %v331 = vpop.permute.xlu0 %330
        %v333 = vlaneseq
        %v334 = vshrl.u32 %v333, 7
        %v335 = vsub.s32 1, %v334
        %v336 = vrot.slane %v317, %v335
        %v337 = vsub.f32 %v331, %v336
        %v338 = vand.u32 2147483647, %v337
        %v339 = vadd.f32 %v328, %v338
        %340 = vset.pattern.permute.xlu0 2
        %341 = vperm.xlu0 %340, %v316
        %v342 = vpop.permute.xlu0 %341
        %v344 = vlaneseq
        %v345 = vshrl.u32 %v344, 7
        %v346 = vsub.s32 2, %v345
        %v347 = vrot.slane %v317, %v346
        %v348 = vsub.f32 %v342, %v347
        %v349 = vand.u32 2147483647, %v348
        %v350 = vadd.f32 %v339, %v349
        %351 = vset.pattern.permute.xlu0 3
        %352 = vperm.xlu0 %351, %v316
        %v353 = vpop.permute.xlu0 %352
        %v355 = vlaneseq
        %v356 = vshrl.u32 %v355, 7
        %v357 = vsub.s32 3, %v356
        %v358 = vrot.slane %v317, %v357
        %v359 = vsub.f32 %v353, %v358
        %v360 = vand.u32 2147483647, %v359
        %v361 = vadd.f32 %v350, %v360
        %v362 = vmul.f32 %v316, 0.5
        %364 = vrot.lane.b32.xlu0 %v362, 126
        %v365 = vpop.permute.xlu0 %364
        %v367 = vsub.f32 %v316, %v365
        %v368 = vadd.f32 %v316, %v365
        %v369 = vmul.f32 %v317, 0.5
        %v371 = vrot.slane %v369, 2
        %v373 = vsub.f32 %v317, %v371
        %v374 = vadd.f32 %v317, %v371
        %375 = vrot.lane.b32.xlu0 %v316, 127
        %v376 = vpop.permute.xlu0 %375
        %v378 = vmul.f32 %v316, %v376
        %v380 = vrot.slane %v317, 1
        %v382 = vmul.f32 %v317, %v380
        %384 = vset.pattern.permute.xlu0 0
        %385 = vperm.xlu0 %384, %v368
        %v386 = vpop.permute.xlu0 %385
        %v388 = vlaneseq
        %v389 = vshrl.u32 %v388, 7
        %v390 = vsub.s32 0, %v389
        %v391 = vrot.slane %v374, %v390
        %v392 = vmin.f32 %v386, %v391
        %394 = vset.pattern.permute.xlu0 0
        %395 = vperm.xlu0 %394, %v367
        %v396 = vpop.permute.xlu0 %395
        %v398 = vlaneseq
        %v399 = vshrl.u32 %v398, 7
        %v400 = vsub.s32 0, %v399
        %v401 = vrot.slane %v373, %v400
        %v402 = vmax.f32 %v396, %v401
        %v403 = vsub.f32 %v392, %v402
        %404 = vset.pattern.permute.xlu0 1
        %405 = vperm.xlu0 %404, %v368
        %v406 = vpop.permute.xlu0 %405
        %v408 = vlaneseq
        %v409 = vshrl.u32 %v408, 7
        %v410 = vsub.s32 1, %v409
        %v411 = vrot.slane %v374, %v410
        %v412 = vmin.f32 %v406, %v411
        %413 = vset.pattern.permute.xlu0 1
        %414 = vperm.xlu0 %413, %v367
        %v415 = vpop.permute.xlu0 %414
        %v417 = vlaneseq
        %v418 = vshrl.u32 %v417, 7
        %v419 = vsub.s32 1, %v418
        %v420 = vrot.slane %v373, %v419
        %v421 = vmax.f32 %v415, %v420
        %v422 = vsub.f32 %v412, %v421
        %v423 = vmax.f32 %v403, 0.0
        %v424 = vmax.f32 %v422, 0.0
        %v425 = vmul.f32 %v423, %v424
        %427 = vset.pattern.permute.xlu0 2
        %428 = vperm.xlu0 %427, %v378
        %v429 = vpop.permute.xlu0 %428
        %v431 = vlaneseq
        %v432 = vshrl.u32 %v431, 7
        %v433 = vsub.s32 2, %v432
        %v434 = vrot.slane %v382, %v433
        %v435 = vadd.f32 %v429, %v434
        %v436 = vsub.f32 %v435, %v425
        %v437 = vadd.f32 %v342, %v347
        %v438 = vsub.f32 %v437, %v403
        %v439 = vadd.f32 %v353, %v358
        %v440 = vsub.f32 %v439, %v422
        %v441 = vmul.f32 %v438, %v440
        %v442 = vmax.f32 %v436, 1e-07
        %v443 = vrcp.pop %v442
        %v444 = vmax.f32 %v441, 1e-07
        %v445 = vrcp.pop %v444
        %v446 = vmul.f32 %v425, %v443
        %v447 = vsub.f32 %v446, 1.0
        %v448 = vmul.f32 %v436, %v445
        %v449 = vadd.f32 %v447, %v448
        %v452 = vunpack.c.l.b16 %v314
        %v453 = vunpack.c.l.b16 %v315
        %v454 = vpack.c.b16 %v453, %v452
        %v456 = vsel %vm289, %v313, 0
        %vm458 = vcmask 1044480
        %v460 = vsel %vm458, %v454, 0
        %462 = vmatprep.subr.bf16.mxu0 0
        %463 = vmatpush1.bf16.msra.mxu0 0
        %464 = vmatprep.subr.bf16.mxu0 0
        %465 = vmatpush1.bf16.msra.mxu0 0
        %466 = vmatprep.subr.bf16.mxu0 0
        %467 = vmatpush1.bf16.msra.mxu0 0
        %468 = vmatprep.subr.bf16.mxu0 0
        %469 = vmatpush1.bf16.msra.mxu0 0
        %470 = vmatprep.subr.bf16.mxu0 0
        %471 = vmatpush1.bf16.msra.mxu0 0
        %472 = vmatprep.subr.bf16.mxu0 0
        %473 = vmatpush1.bf16.msra.mxu0 0
        %474 = vmatprep.subr.bf16.mxu0 0
        %475 = vmatpush1.bf16.msra.mxu0 0
        %476 = vmatprep.subr.bf16.mxu0 0
        %477 = vmatpush1.bf16.msra.mxu0 %v460
        %478 = vmatprep.subr.bf16.mxu0 0
        %479 = vmatpush2.bf16.msra.mxu0 0
        %480 = vmatprep.subr.bf16.mxu0 0
        %481 = vmatpush2.bf16.msra.mxu0 0
        %482 = vmatprep.subr.bf16.mxu0 0
        %483 = vmatpush2.bf16.msra.mxu0 0
        %484 = vmatprep.subr.bf16.mxu0 0
        %485 = vmatpush2.bf16.msra.mxu0 0
        %486 = vmatprep.subr.bf16.mxu0 0
        %487 = vmatpush2.bf16.msra.mxu0 0
        %488 = vmatprep.subr.bf16.mxu0 0
        %489 = vmatpush2.bf16.msra.mxu0 0
        %490 = vmatprep.subr.bf16.mxu0 0
        %491 = vmatpush2.bf16.msra.mxu0 0
        %492 = vmatprep.subr.bf16.mxu0 0
        %493 = vmatpush2.bf16.msra.mxu0 0
        %494 = vmatprep.mubr.bf16.mxu0 0
        %495 = vmatmul.mubr.bf16.gmra.mxu0 %v456
        %v496 = vpop.f32.mrf.mxu0
        %v497 = vadd.f32 %v361, %v496
        %v498 = vpop.f32.mrf.mxu0
        %v499 = vpop.f32.mrf.mxu0
        %v500 = vpop.f32.mrf.mxu0
        %501 = vdwg.mxu0
        %v502 = vsub.f32 %v497, %v449
        %503 = vst [vmem:[%s259] sm:$0xff] %v502
        %s504 = sand.u32 %s148, 1
        %s505 = scalar_lea.sflag [#allocation3], %s504
        %s506 = sand.u32 %s148, 1
        %s507 = smul.addr %s506, 8
        %s508 = scalar_lea.vmem [#allocation2], %s507
        // Predicated region
        $region37: #{tpu_custom_call.1} parent=35 // pred_check
          %p509 = pneg %p158
        $region38: #{tpu_custom_call.1} parent=35 // pred_check_branch
          %511 = sbr.rel (%p509) target = $region40
        $region39: #{tpu_custom_call.1} parent=35 // pred_region
          %s513 = ssub.s32 128, 128
          %514 = vsyncadd %s505, %s513
          %s515 = sadd.s32 %s23, %s22
          %s516 = smul.addr %s515, 128
          %s517 = scalar_lea.hbm %s4, %s516
          %s519 = sshll.u32 %s508, 4
          %s520 = int_to_ptr.vmem [resolvable:$true] %s519
          %522 = dma.vmem_to_hbm [thread:$0]  %s520, 128, %s517, %s505
        $region40: #{tpu_custom_call.1} parent=35 // pred_fallthru
          _
      $region36: #{tpu_custom_call.1} parent=5 // pred_fallthru
        _
      %p523 = scmp.le.s32.totalorder 2, %s13
      // Predicated region
      $region41: #{tpu_custom_call.1} parent=5 // pred_check
        %p524 = pneg %p523
      $region42: #{tpu_custom_call.1} parent=5 // pred_check_branch
        %526 = sbr.rel (%p524) target = $region44
      $region43: #{tpu_custom_call.1} parent=5 // pred_region
        %s527 = ssub.s32 %s13, 2
        // Predicated region
        $region45: #{tpu_custom_call.1} parent=43 // pred_check
          %p528 = pneg %p164
        $region46: #{tpu_custom_call.1} parent=43 // pred_check_branch
          %530 = sbr.rel (%p528) target = $region48
        $region47: #{tpu_custom_call.1} parent=43 // pred_region
          %s531 = sand.u32 %s149, 1
          %s532 = scalar_lea.sflag [#allocation3], %s531
          %s533 = sand.u32 %s149, 1
          %s534 = smul.addr %s533, 8
          %s535 = scalar_lea.vmem [#allocation2], %s534
          %536 = dma.done %s532, 128
        $region48: #{tpu_custom_call.1} parent=43 // pred_fallthru
          _
      $region44: #{tpu_custom_call.1} parent=5 // pred_fallthru
        _
    $region6: #{tpu_custom_call.1} parent=1 // loop_footer
      %s17 = sadd.s32 1, %s13
    $region7: #{tpu_custom_call.1} parent=1 // loop_footer_branch
      %12 = sbr.rel target = $region3
    $region8: #{tpu_custom_call.1} parent=1 // loop_exit
      _
    %537 = vsyncpa [#allocation3], 1
    %s538 = scalar_lea.sflag [#allocation3], 1
    %539 = vsyncpa %s538, 1

</llo_original>
